<compile_context>
chip_gen: v6e
topology: v6e:2x2x1
jax: 0.10.0
libtpu: 0.0.40
codegen_flags: <defaults>
</compile_context>

<pallas_src>
import jax
import jax.numpy as jnp
from jax.experimental import pallas as pl
from jax.experimental.pallas import tpu as pltpu


def botnet_kernel(w1_ref, b1_ref, w2_ref, b2_ref, x_ref, o_ref):
    # x_ref : (3, TILE_ROWS, 128) f32 VMEM -- batch packed on sublanes+lanes.
    # w1_ref: (18,) f32 SMEM = fc1.weight (6,3) flattened row-major (out, in)
    # b1_ref: (6,)  f32 SMEM = fc1.bias
    # w2_ref: (6,)  f32 SMEM = fc2.weight (1,6) flattened
    # b2_ref: (1,)  f32 SMEM = fc2.bias
    # o_ref : (TILE_ROWS, 128) output tile.
    x0 = x_ref[0]                      # (TILE_ROWS, 128)
    x1 = x_ref[1]
    x2 = x_ref[2]

    # fc2 bias: broadcast once per tile (hoisted, not re-broadcast per unit).
    y = jnp.zeros_like(x0) + b2_ref[0]

    # Unrolled fc1 (+ ReLU) fused with the fc2 accumulation.
    # 6 hidden units * (3 FMA + bias + relu + FMA) of lane-parallel VPU work,
    # scalar (SMEM) weights broadcast across all lanes/sublanes.
    for j in range(6):
        h = (x0 * w1_ref[3 * j + 0]
             + x1 * w1_ref[3 * j + 1]
             + x2 * w1_ref[3 * j + 2]
             + b1_ref[j])
        h = jnp.maximum(h, 0.0)        # ReLU
        y = y + h * w2_ref[j]

    # sigmoid(y) = 1 / (1 + exp(-y)); exp and approx-recip both go to the EUP.
    o_ref[...] = pl.reciprocal(1.0 + jnp.exp(-y), approx=True).astype(o_ref.dtype)


# 4096 rows x 128 lanes = 512K elems/tile -> 8 MiB HBM per step,
# 2 * (3 + 1) * 4 B * 512K = 16 MiB of double-buffered VMEM.
_MAX_TILE_ROWS = 4096


def _round_up(n, m):
    return ((n + m - 1) // m) * m


def botnet_forward(x, w1, b1, w2, b2, *, tile_rows=None, out_dtype=jnp.float32):
    """x: (B, 3); w1: (6, 3); b1: (6,); w2: (1, 6); b2: (1,) -> (B, 1)."""
    B = x.shape[0]
    r_min = max(1, -(-B // 128))                 # rows of 128 lanes needed

    if tile_rows is None:
        if r_min <= _MAX_TILE_ROWS:
            tile_rows = _round_up(r_min, 8)
        else:
            # Balance tiles so every grid step (and every v7x TensorCore)
            # gets roughly equal work.
            n = -(-r_min // _MAX_TILE_ROWS)
            tile_rows = _round_up(-(-r_min // n), 8)
    assert tile_rows >= 8 and tile_rows % 8 == 0, (
        "tile_rows must be a positive multiple of 8 (sublane packing)")

    n_tiles = -(-r_min // tile_rows)
    r_pad = n_tiles * tile_rows
    b_pad = r_pad * 128

    # Feature-major activations (3, B) -> (3, r_pad, 128); the reshape is free
    # (identical HBM layout).  Padded tail lanes are zeros, flow through
    # exp/reciprocal harmlessly, and are discarded below.
    # TODO(synk): produce feature-major (3, B) upstream to avoid the extra
    # transpose/pad HBM pass on large batches.
    xt = x.T.astype(jnp.float32)                 # (3, B)
    if b_pad != B:
        xt = jnp.pad(xt, ((0, 0), (0, b_pad - B)))
    xt = xt.reshape(3, r_pad, 128)

    w1_flat = w1.reshape(-1).astype(jnp.float32)   # (18,)
    b1_flat = b1.reshape(-1).astype(jnp.float32)   # (6,)
    w2_flat = w2.reshape(-1).astype(jnp.float32)   # (6,)
    b2_flat = b2.reshape(-1).astype(jnp.float32)   # (1,)

    smem = pl.BlockSpec(memory_space=pltpu.MemorySpace.SMEM)
    out = pl.pallas_call(
        botnet_kernel,
        out_shape=jax.ShapeDtypeStruct((r_pad, 128), out_dtype),
        grid=(n_tiles,),
        in_specs=[
            smem,                                              # w1 (scalars)
            smem,                                              # b1
            smem,                                              # w2
            smem,                                              # b2
            pl.BlockSpec((3, tile_rows, 128), lambda i: (0, i, 0)),  # x tile
        ],
        out_specs=pl.BlockSpec((tile_rows, 128), lambda i: (i, 0)),
        compiler_params=pltpu.CompilerParams(
            dimension_semantics=("parallel",),     # megacore split on v7x
            vmem_limit_bytes=32 * 1024 * 1024,     # raise v5e's 16 MiB default
        ),
    )(w1_flat, b1_flat, w2_flat, b2_flat, xt)

    return out.reshape(-1)[:B].reshape(B, 1)


def init_params(key):
    """PyTorch nn.Linear-shaped params: fc1 W(6,3)/b(6,), fc2 W(1,6)/b(1,)."""
    k1, k2, k3, k4 = jax.random.split(key, 4)
    lim1 = 1.0 / jnp.sqrt(3.0)
    lim2 = 1.0 / jnp.sqrt(6.0)
    w1 = jax.random.uniform(k1, (6, 3), jnp.float32, -lim1, lim1)
    b1 = jax.random.uniform(k2, (6,), jnp.float32, -lim1, lim1)
    w2 = jax.random.uniform(k3, (1, 6), jnp.float32, -lim2, lim2)
    b2 = jax.random.uniform(k4, (1,), jnp.float32, -lim2, lim2)
    return w1, b1, w2, b2


def reference_forward(x, w1, b1, w2, b2):
    h = jnp.maximum(x @ w1.T + b1, 0.0)
    return jax.nn.sigmoid(h @ w2.T + b2)


if __name__ == "__main__":
    key = jax.random.PRNGKey(0)
    kx, kx2, kp = jax.random.split(key, 3)
    w1, b1, w2, b2 = init_params(kp)

    # Small demo batch (padded to a single (8, 128) tile inside the wrapper).
    B = 8
    x = jax.random.normal(kx, (B, 3), jnp.float32)
    out = jax.block_until_ready(botnet_forward(x, w1, b1, w2, b2))
    ref = reference_forward(x, w1, b1, w2, b2)
    assert out.shape == (B, 1)
    # Tolerance accounts for the EUP approximate reciprocal in the sigmoid.
    assert jnp.allclose(out, ref, atol=2e-3, rtol=2e-3), (out, ref)

    # Ragged, multi-tile batch to exercise the grid + padding path.
    B2 = 2500
    x2 = jax.random.normal(kx2, (B2, 3), jnp.float32)
    out2 = jax.block_until_ready(
        botnet_forward(x2, w1, b1, w2, b2, tile_rows=8))
    ref2 = reference_forward(x2, w1, b1, w2, b2)
    assert out2.shape == (B2, 1)
    assert jnp.allclose(out2, ref2, atol=2e-3, rtol=2e-3), (out2, ref2)

    print("KERNEL_OK")
</pallas_src>

<mosaic_0001>
module attributes {stable_mosaic.version = 11 : i64} {
  func.func @botnet_kernel(%arg0: i32, %arg1: memref<18xf32, #tpu.memory_space<smem>>, %arg2: memref<6xf32, #tpu.memory_space<smem>>, %arg3: memref<6xf32, #tpu.memory_space<smem>>, %arg4: memref<1xf32, #tpu.memory_space<smem>>, %arg5: memref<3x8x128xf32, #tpu.memory_space<vmem>>, %arg6: memref<8x128xf32, #tpu.memory_space<vmem>>) attributes {dimension_semantics = [#tpu.dimension_semantics<parallel>], iteration_bounds = array<i64: 1>, scalar_prefetch = 0 : i64, scratch_operands = 0 : i64, tpu.core_type = #tpu.core_type<tc>, window_params = [{transform_indices = @transform_0, window_bounds = array<i64: 18>}, {transform_indices = @transform_1, window_bounds = array<i64: 6>}, {transform_indices = @transform_2, window_bounds = array<i64: 6>}, {transform_indices = @transform_3, window_bounds = array<i64: 1>}, {transform_indices = @transform_4, window_bounds = array<i64: 3, 8, 128>}, {transform_indices = @transform_5, window_bounds = array<i64: 8, 128>}]} {
    %c0 = arith.constant 0 : index
    %c0_0 = arith.constant 0 : index
    %c0_1 = arith.constant 0 : index
    %0 = vector.load %arg5[%c0, %c0_0, %c0_1] : memref<3x8x128xf32, #tpu.memory_space<vmem>>, vector<1x8x128xf32>
    %1 = vector.shape_cast %0 : vector<1x8x128xf32> to vector<8x128xf32>
    %c1 = arith.constant 1 : index
    %c0_2 = arith.constant 0 : index
    %c0_3 = arith.constant 0 : index
    %2 = vector.load %arg5[%c1, %c0_2, %c0_3] : memref<3x8x128xf32, #tpu.memory_space<vmem>>, vector<1x8x128xf32>
    %3 = vector.shape_cast %2 : vector<1x8x128xf32> to vector<8x128xf32>
    %c2 = arith.constant 2 : index
    %c0_4 = arith.constant 0 : index
    %c0_5 = arith.constant 0 : index
    %4 = vector.load %arg5[%c2, %c0_4, %c0_5] : memref<3x8x128xf32, #tpu.memory_space<vmem>>, vector<1x8x128xf32>
    %5 = vector.shape_cast %4 : vector<1x8x128xf32> to vector<8x128xf32>
    %cst = arith.constant 0.000000e+00 : f32
    %6 = vector.broadcast %cst : f32 to vector<8x128xf32>
    %c0_6 = arith.constant 0 : index
    %7 = memref.load %arg4[%c0_6] : memref<1xf32, #tpu.memory_space<smem>>
    %8 = vector.broadcast %7 : f32 to vector<8x128xf32>
    %9 = arith.addf %6, %8 : vector<8x128xf32>
    %c0_7 = arith.constant 0 : index
    %10 = memref.load %arg1[%c0_7] : memref<18xf32, #tpu.memory_space<smem>>
    %11 = vector.broadcast %10 : f32 to vector<8x128xf32>
    %12 = arith.mulf %1, %11 : vector<8x128xf32>
    %c1_8 = arith.constant 1 : index
    %13 = memref.load %arg1[%c1_8] : memref<18xf32, #tpu.memory_space<smem>>
    %14 = vector.broadcast %13 : f32 to vector<8x128xf32>
    %15 = arith.mulf %3, %14 : vector<8x128xf32>
    %16 = arith.addf %12, %15 : vector<8x128xf32>
    %c2_9 = arith.constant 2 : index
    %17 = memref.load %arg1[%c2_9] : memref<18xf32, #tpu.memory_space<smem>>
    %18 = vector.broadcast %17 : f32 to vector<8x128xf32>
    %19 = arith.mulf %5, %18 : vector<8x128xf32>
    %20 = arith.addf %16, %19 : vector<8x128xf32>
    %c0_10 = arith.constant 0 : index
    %21 = memref.load %arg2[%c0_10] : memref<6xf32, #tpu.memory_space<smem>>
    %22 = vector.broadcast %21 : f32 to vector<8x128xf32>
    %23 = arith.addf %20, %22 : vector<8x128xf32>
    %cst_11 = arith.constant 0.000000e+00 : f32
    %24 = vector.broadcast %cst_11 : f32 to vector<8x128xf32>
    %25 = arith.maximumf %23, %24 : vector<8x128xf32>
    %c0_12 = arith.constant 0 : index
    %26 = memref.load %arg3[%c0_12] : memref<6xf32, #tpu.memory_space<smem>>
    %27 = vector.broadcast %26 : f32 to vector<8x128xf32>
    %28 = arith.mulf %25, %27 : vector<8x128xf32>
    %29 = arith.addf %9, %28 : vector<8x128xf32>
    %c3 = arith.constant 3 : index
    %30 = memref.load %arg1[%c3] : memref<18xf32, #tpu.memory_space<smem>>
    %31 = vector.broadcast %30 : f32 to vector<8x128xf32>
    %32 = arith.mulf %1, %31 : vector<8x128xf32>
    %c4 = arith.constant 4 : index
    %33 = memref.load %arg1[%c4] : memref<18xf32, #tpu.memory_space<smem>>
    %34 = vector.broadcast %33 : f32 to vector<8x128xf32>
    %35 = arith.mulf %3, %34 : vector<8x128xf32>
    %36 = arith.addf %32, %35 : vector<8x128xf32>
    %c5 = arith.constant 5 : index
    %37 = memref.load %arg1[%c5] : memref<18xf32, #tpu.memory_space<smem>>
    %38 = vector.broadcast %37 : f32 to vector<8x128xf32>
    %39 = arith.mulf %5, %38 : vector<8x128xf32>
    %40 = arith.addf %36, %39 : vector<8x128xf32>
    %c1_13 = arith.constant 1 : index
    %41 = memref.load %arg2[%c1_13] : memref<6xf32, #tpu.memory_space<smem>>
    %42 = vector.broadcast %41 : f32 to vector<8x128xf32>
    %43 = arith.addf %40, %42 : vector<8x128xf32>
    %cst_14 = arith.constant 0.000000e+00 : f32
    %44 = vector.broadcast %cst_14 : f32 to vector<8x128xf32>
    %45 = arith.maximumf %43, %44 : vector<8x128xf32>
    %c1_15 = arith.constant 1 : index
    %46 = memref.load %arg3[%c1_15] : memref<6xf32, #tpu.memory_space<smem>>
    %47 = vector.broadcast %46 : f32 to vector<8x128xf32>
    %48 = arith.mulf %45, %47 : vector<8x128xf32>
    %49 = arith.addf %29, %48 : vector<8x128xf32>
    %c6 = arith.constant 6 : index
    %50 = memref.load %arg1[%c6] : memref<18xf32, #tpu.memory_space<smem>>
    %51 = vector.broadcast %50 : f32 to vector<8x128xf32>
    %52 = arith.mulf %1, %51 : vector<8x128xf32>
    %c7 = arith.constant 7 : index
    %53 = memref.load %arg1[%c7] : memref<18xf32, #tpu.memory_space<smem>>
    %54 = vector.broadcast %53 : f32 to vector<8x128xf32>
    %55 = arith.mulf %3, %54 : vector<8x128xf32>
    %56 = arith.addf %52, %55 : vector<8x128xf32>
    %c8 = arith.constant 8 : index
    %57 = memref.load %arg1[%c8] : memref<18xf32, #tpu.memory_space<smem>>
    %58 = vector.broadcast %57 : f32 to vector<8x128xf32>
    %59 = arith.mulf %5, %58 : vector<8x128xf32>
    %60 = arith.addf %56, %59 : vector<8x128xf32>
    %c2_16 = arith.constant 2 : index
    %61 = memref.load %arg2[%c2_16] : memref<6xf32, #tpu.memory_space<smem>>
    %62 = vector.broadcast %61 : f32 to vector<8x128xf32>
    %63 = arith.addf %60, %62 : vector<8x128xf32>
    %cst_17 = arith.constant 0.000000e+00 : f32
    %64 = vector.broadcast %cst_17 : f32 to vector<8x128xf32>
    %65 = arith.maximumf %63, %64 : vector<8x128xf32>
    %c2_18 = arith.constant 2 : index
    %66 = memref.load %arg3[%c2_18] : memref<6xf32, #tpu.memory_space<smem>>
    %67 = vector.broadcast %66 : f32 to vector<8x128xf32>
    %68 = arith.mulf %65, %67 : vector<8x128xf32>
    %69 = arith.addf %49, %68 : vector<8x128xf32>
    %c9 = arith.constant 9 : index
    %70 = memref.load %arg1[%c9] : memref<18xf32, #tpu.memory_space<smem>>
    %71 = vector.broadcast %70 : f32 to vector<8x128xf32>
    %72 = arith.mulf %1, %71 : vector<8x128xf32>
    %c10 = arith.constant 10 : index
    %73 = memref.load %arg1[%c10] : memref<18xf32, #tpu.memory_space<smem>>
    %74 = vector.broadcast %73 : f32 to vector<8x128xf32>
    %75 = arith.mulf %3, %74 : vector<8x128xf32>
    %76 = arith.addf %72, %75 : vector<8x128xf32>
    %c11 = arith.constant 11 : index
    %77 = memref.load %arg1[%c11] : memref<18xf32, #tpu.memory_space<smem>>
    %78 = vector.broadcast %77 : f32 to vector<8x128xf32>
    %79 = arith.mulf %5, %78 : vector<8x128xf32>
    %80 = arith.addf %76, %79 : vector<8x128xf32>
    %c3_19 = arith.constant 3 : index
    %81 = memref.load %arg2[%c3_19] : memref<6xf32, #tpu.memory_space<smem>>
    %82 = vector.broadcast %81 : f32 to vector<8x128xf32>
    %83 = arith.addf %80, %82 : vector<8x128xf32>
    %cst_20 = arith.constant 0.000000e+00 : f32
    %84 = vector.broadcast %cst_20 : f32 to vector<8x128xf32>
    %85 = arith.maximumf %83, %84 : vector<8x128xf32>
    %c3_21 = arith.constant 3 : index
    %86 = memref.load %arg3[%c3_21] : memref<6xf32, #tpu.memory_space<smem>>
    %87 = vector.broadcast %86 : f32 to vector<8x128xf32>
    %88 = arith.mulf %85, %87 : vector<8x128xf32>
    %89 = arith.addf %69, %88 : vector<8x128xf32>
    %c12 = arith.constant 12 : index
    %90 = memref.load %arg1[%c12] : memref<18xf32, #tpu.memory_space<smem>>
    %91 = vector.broadcast %90 : f32 to vector<8x128xf32>
    %92 = arith.mulf %1, %91 : vector<8x128xf32>
    %c13 = arith.constant 13 : index
    %93 = memref.load %arg1[%c13] : memref<18xf32, #tpu.memory_space<smem>>
    %94 = vector.broadcast %93 : f32 to vector<8x128xf32>
    %95 = arith.mulf %3, %94 : vector<8x128xf32>
    %96 = arith.addf %92, %95 : vector<8x128xf32>
    %c14 = arith.constant 14 : index
    %97 = memref.load %arg1[%c14] : memref<18xf32, #tpu.memory_space<smem>>
    %98 = vector.broadcast %97 : f32 to vector<8x128xf32>
    %99 = arith.mulf %5, %98 : vector<8x128xf32>
    %100 = arith.addf %96, %99 : vector<8x128xf32>
    %c4_22 = arith.constant 4 : index
    %101 = memref.load %arg2[%c4_22] : memref<6xf32, #tpu.memory_space<smem>>
    %102 = vector.broadcast %101 : f32 to vector<8x128xf32>
    %103 = arith.addf %100, %102 : vector<8x128xf32>
    %cst_23 = arith.constant 0.000000e+00 : f32
    %104 = vector.broadcast %cst_23 : f32 to vector<8x128xf32>
    %105 = arith.maximumf %103, %104 : vector<8x128xf32>
    %c4_24 = arith.constant 4 : index
    %106 = memref.load %arg3[%c4_24] : memref<6xf32, #tpu.memory_space<smem>>
    %107 = vector.broadcast %106 : f32 to vector<8x128xf32>
    %108 = arith.mulf %105, %107 : vector<8x128xf32>
    %109 = arith.addf %89, %108 : vector<8x128xf32>
    %c15 = arith.constant 15 : index
    %110 = memref.load %arg1[%c15] : memref<18xf32, #tpu.memory_space<smem>>
    %111 = vector.broadcast %110 : f32 to vector<8x128xf32>
    %112 = arith.mulf %1, %111 : vector<8x128xf32>
    %c16 = arith.constant 16 : index
    %113 = memref.load %arg1[%c16] : memref<18xf32, #tpu.memory_space<smem>>
    %114 = vector.broadcast %113 : f32 to vector<8x128xf32>
    %115 = arith.mulf %3, %114 : vector<8x128xf32>
    %116 = arith.addf %112, %115 : vector<8x128xf32>
    %c17 = arith.constant 17 : index
    %117 = memref.load %arg1[%c17] : memref<18xf32, #tpu.memory_space<smem>>
    %118 = vector.broadcast %117 : f32 to vector<8x128xf32>
    %119 = arith.mulf %5, %118 : vector<8x128xf32>
    %120 = arith.addf %116, %119 : vector<8x128xf32>
    %c5_25 = arith.constant 5 : index
    %121 = memref.load %arg2[%c5_25] : memref<6xf32, #tpu.memory_space<smem>>
    %122 = vector.broadcast %121 : f32 to vector<8x128xf32>
    %123 = arith.addf %120, %122 : vector<8x128xf32>
    %cst_26 = arith.constant 0.000000e+00 : f32
    %124 = vector.broadcast %cst_26 : f32 to vector<8x128xf32>
    %125 = arith.maximumf %123, %124 : vector<8x128xf32>
    %c5_27 = arith.constant 5 : index
    %126 = memref.load %arg3[%c5_27] : memref<6xf32, #tpu.memory_space<smem>>
    %127 = vector.broadcast %126 : f32 to vector<8x128xf32>
    %128 = arith.mulf %125, %127 : vector<8x128xf32>
    %129 = arith.addf %109, %128 : vector<8x128xf32>
    %cst_28 = arith.constant 0.000000e+00 : f32
    %130 = vector.broadcast %cst_28 : f32 to vector<8x128xf32>
    %131 = arith.subf %130, %129 : vector<8x128xf32>
    %132 = math.exp %131 : vector<8x128xf32>
    %cst_29 = arith.constant 1.000000e+00 : f32
    %133 = vector.broadcast %cst_29 : f32 to vector<8x128xf32>
    %134 = arith.addf %133, %132 : vector<8x128xf32>
    %135 = tpu.reciprocal %134 {approx = true} : vector<8x128xf32> -> vector<8x128xf32>
    %c0_30 = arith.constant 0 : index
    %c0_31 = arith.constant 0 : index
    %136 = vector.load %arg6[%c0_30, %c0_31] : memref<8x128xf32, #tpu.memory_space<vmem>>, vector<8x128xf32>
    tpu.vector_store %arg6[%c0_30, %c0_31], %135 {strides = array<i32>} : memref<8x128xf32, #tpu.memory_space<vmem>>, vector<8x128xf32>,
    return
  }
  func.func @transform_0(%arg0: i32) -> i32 {
    %c0_i32 = arith.constant 0 : i32
    %c0_i32_0 = arith.constant 0 : i32
    return %c0_i32 : i32
  }
  func.func @transform_1(%arg0: i32) -> i32 {
    %c0_i32 = arith.constant 0 : i32
    %c0_i32_0 = arith.constant 0 : i32
    return %c0_i32 : i32
  }
  func.func @transform_2(%arg0: i32) -> i32 {
    %c0_i32 = arith.constant 0 : i32
    %c0_i32_0 = arith.constant 0 : i32
    return %c0_i32 : i32
  }
  func.func @transform_3(%arg0: i32) -> i32 {
    %c0_i32 = arith.constant 0 : i32
    %c0_i32_0 = arith.constant 0 : i32
    return %c0_i32 : i32
  }
  func.func @transform_4(%arg0: i32) -> (i32, i32, i32) {
    %c0_i32 = arith.constant 0 : i32
    %c0_i32_0 = arith.constant 0 : i32
    %c0_i32_1 = arith.constant 0 : i32
    return %c0_i32, %arg0, %c0_i32_0 : i32, i32, i32
  }
  func.func @transform_5(%arg0: i32) -> (i32, i32) {
    %c0_i32 = arith.constant 0 : i32
    %c0_i32_0 = arith.constant 0 : i32
    return %arg0, %c0_i32 : i32, i32
  }
}

</mosaic_0001>

<llo_original>
// kernel: tpu_custom_call.1
$region0: #{tpu_custom_call.1}
  #allocation0 [shape = 'u32[]', space=smem, size = 0x4, offset = 0x4, fixed_abs, tag = 'smem constant byte address 0x4 - core index']
  #allocation1 [shape = 'u32[144,128]{1,0:T(1,128)}', space=vmem, size = 0x12000, scoped, tag = 'internal scratch']
  #allocation2 [shape = 'f32[1]{0:T(128)S(6)}', space=smem, size = 0x200, scoped, tag = 'scoped memory for tpu_custom_call.1']
  %s0 = inlined_call_operand.vmem [shape: f32[18], index: 0, kind: input, shape index: {}]
  %s1 = inlined_call_operand.vmem [shape: f32[6], index: 1, kind: input, shape index: {}]
  %s2 = inlined_call_operand.vmem [shape: f32[6], index: 2, kind: input, shape index: {}]
  %s3 = inlined_call_operand.<no memory space> [shape: f32[1], index: 3, kind: input, shape index: {}]
  %s4 = inlined_call_operand.hbm [shape: f32[3,8,128], index: 4, kind: input, shape index: {}]
  %s5 = inlined_call_operand.hbm [shape: f32[8,128], index: 5, kind: output, shape index: {}]
  %s6 = sld [smem:[#allocation0]]
  $region46: #{tpu_custom_call.1} parent=0
    _
  %s8 = ssub.s32 1, %s6
  %s9 = scalar_select 0, %s8, %s6
  %10 = sst [smem:[#allocation2]] %s3
  $region1: #{tpu_custom_call.1} parent=0
    #allocation3 [shape = 'u8[512]{0}', space=smem, size = 0x200, scoped, tag = 'input window, operand 0, single buffered']
    #allocation4 [shape = 's32[1]{0}', space=sflag, size = 0x4, scoped, tag = 'scoped memory for tpu_custom_call.1']
    #allocation5 [shape = 's32[1]{0}', space=sflag, size = 0x4, scoped, tag = 'scoped memory for tpu_custom_call.1']
    #allocation6 [shape = 's32[1]{0}', space=sflag, size = 0x4, scoped, tag = 'scoped memory for tpu_custom_call.1']
    #allocation7 [shape = 'u8[512]{0}', space=smem, size = 0x200, scoped, tag = 'input window, operand 1, single buffered']
    #allocation8 [shape = 's32[1]{0}', space=sflag, size = 0x4, scoped, tag = 'scoped memory for tpu_custom_call.1']
    #allocation9 [shape = 'u8[512]{0}', space=smem, size = 0x200, scoped, tag = 'input window, operand 2, single buffered']
    #allocation10 [shape = 'u8[12288]{0}', space=vmem, size = 0x3000, scoped, tag = 'input window, operand 4, single buffered']
    #allocation11 [shape = 'u8[4096]{0}', space=vmem, size = 0x1000, scoped, tag = 'output window, operand 0, single buffered']
    %11 = vsyncpa [#allocation6], 0
    %12 = vsyncpa [#allocation8], 0
    %13 = vsyncpa [#allocation4], 0
    %14 = vsyncpa [#allocation5], 0
    // Predicated region
    $region2: #{tpu_custom_call.1} parent=1 // pred_check
      _
    $region3: #{tpu_custom_call.1} parent=1 // pred_check_branch
      %16 = sbr.rel (0) target = $region5
    $region4: #{tpu_custom_call.1} parent=1 // pred_region
      %s18 = ssub.s32 16, 16
      %19 = vsyncadd [#allocation6], %s18
      %s21 = sshll.u32 %s0, 4
      %s22 = int_to_ptr.vmem [resolvable:$true] %s21
      %24 = dma.vmem_to_smem %s22, 16, [#allocation3], [#allocation6]
    $region5: #{tpu_custom_call.1} parent=1 // pred_fallthru
      _
    // Predicated region
    $region6: #{tpu_custom_call.1} parent=1 // pred_check
      _
    $region7: #{tpu_custom_call.1} parent=1 // pred_check_branch
      %26 = sbr.rel (0) target = $region9
    $region8: #{tpu_custom_call.1} parent=1 // pred_region
      %s28 = ssub.s32 16, 16
      %29 = vsyncadd [#allocation8], %s28
      %s31 = sshll.u32 %s1, 4
      %s32 = int_to_ptr.vmem [resolvable:$true] %s31
      %34 = dma.vmem_to_smem %s32, 16, [#allocation7], [#allocation8]
    $region9: #{tpu_custom_call.1} parent=1 // pred_fallthru
      _
    // Predicated region
    $region10: #{tpu_custom_call.1} parent=1 // pred_check
      _
    $region11: #{tpu_custom_call.1} parent=1 // pred_check_branch
      %36 = sbr.rel (0) target = $region13
    $region12: #{tpu_custom_call.1} parent=1 // pred_region
      %s38 = ssub.s32 16, 16
      %39 = vsyncadd [#allocation8], %s38
      %s41 = sshll.u32 %s2, 4
      %s42 = int_to_ptr.vmem [resolvable:$true] %s41
      %44 = dma.vmem_to_smem %s42, 16, [#allocation9], [#allocation8]
    $region13: #{tpu_custom_call.1} parent=1 // pred_fallthru
      _
    // Predicated region
    $region14: #{tpu_custom_call.1} parent=1 // pred_check
      _
    $region15: #{tpu_custom_call.1} parent=1 // pred_check_branch
      %46 = sbr.rel (0) target = $region17
    $region16: #{tpu_custom_call.1} parent=1 // pred_region
      _
    $region17: #{tpu_custom_call.1} parent=1 // pred_fallthru
      _
    // Predicated region
    $region18: #{tpu_custom_call.1} parent=1 // pred_check
      _
    $region19: #{tpu_custom_call.1} parent=1 // pred_check_branch
      %48 = sbr.rel (0) target = $region21
    $region20: #{tpu_custom_call.1} parent=1 // pred_region
      %s50 = ssub.s32 384, 384
      %51 = vsyncadd [#allocation4], %s50
      %s52 = sshll.u32 [#allocation10], 4
      %s53 = int_to_ptr.vmem [resolvable:$true] %s52
      %58 = dma.hbm_to_vmem [thread:$0]  %s4, 384, %s53, [#allocation4], 128, 128, 8
    $region21: #{tpu_custom_call.1} parent=1 // pred_fallthru
      _
    // Predicated region
    $region22: #{tpu_custom_call.1} parent=1 // pred_check
      _
    $region23: #{tpu_custom_call.1} parent=1 // pred_check_branch
      %60 = sbr.rel (0) target = $region25
    $region24: #{tpu_custom_call.1} parent=1 // pred_region
      %61 = dma.done [#allocation6], 16
    $region25: #{tpu_custom_call.1} parent=1 // pred_fallthru
      _
    // Predicated region
    $region26: #{tpu_custom_call.1} parent=1 // pred_check
      _
    $region27: #{tpu_custom_call.1} parent=1 // pred_check_branch
      %63 = sbr.rel (0) target = $region29
    $region28: #{tpu_custom_call.1} parent=1 // pred_region
      %64 = dma.done [#allocation8], 16
    $region29: #{tpu_custom_call.1} parent=1 // pred_fallthru
      _
    // Predicated region
    $region30: #{tpu_custom_call.1} parent=1 // pred_check
      _
    $region31: #{tpu_custom_call.1} parent=1 // pred_check_branch
      %66 = sbr.rel (0) target = $region33
    $region32: #{tpu_custom_call.1} parent=1 // pred_region
      %67 = dma.done [#allocation8], 16
    $region33: #{tpu_custom_call.1} parent=1 // pred_fallthru
      _
    // Predicated region
    $region34: #{tpu_custom_call.1} parent=1 // pred_check
      _
    $region35: #{tpu_custom_call.1} parent=1 // pred_check_branch
      %69 = sbr.rel (0) target = $region37
    $region36: #{tpu_custom_call.1} parent=1 // pred_region
      %70 = dma.done [#allocation4], 384
    $region37: #{tpu_custom_call.1} parent=1 // pred_fallthru
      _
    %71 = sfence
    %v72 = vld [vmem:[#allocation10] sm:$0xff]
    %s73 = scalar_lea.vmem [#allocation10], 8
    %v74 = vld [vmem:[%s73] sm:$0xff]
    %s75 = scalar_lea.vmem [#allocation10], 16
    %v76 = vld [vmem:[%s75] sm:$0xff]
    %s77 = sld [smem:[#allocation2]]
    %v78 = vstv %s77
    %v79 = vadd.f32 %v78, 0.0
    %s80 = sld [smem:[#allocation3]]
    %v81 = vstv %s80
    %v82 = vmul.f32 %v72, %v81
    %s83 = sld [smem:[#allocation3 + $0x1]]
    %v84 = vstv %s83
    %v85 = vmul.f32 %v74, %v84
    %v86 = vadd.f32 %v82, %v85
    %s87 = sld [smem:[#allocation3 + $0x2]]
    %v88 = vstv %s87
    %v89 = vmul.f32 %v76, %v88
    %v90 = vadd.f32 %v86, %v89
    %s91 = sld [smem:[#allocation7]]
    %v92 = vstv %s91
    %v93 = vadd.f32 %v90, %v92
    %v94 = vmax.f32 %v93, 0.0
    %s95 = sld [smem:[#allocation9]]
    %v96 = vstv %s95
    %v97 = vmul.f32 %v94, %v96
    %v98 = vadd.f32 %v79, %v97
    %s99 = sld [smem:[#allocation3 + $0x3]]
    %v100 = vstv %s99
    %v101 = vmul.f32 %v72, %v100
    %s102 = sld [smem:[#allocation3 + $0x4]]
    %v103 = vstv %s102
    %v104 = vmul.f32 %v74, %v103
    %v105 = vadd.f32 %v101, %v104
    %s106 = sld [smem:[#allocation3 + $0x5]]
    %v107 = vstv %s106
    %v108 = vmul.f32 %v76, %v107
    %v109 = vadd.f32 %v105, %v108
    %s110 = sld [smem:[#allocation7 + $0x1]]
    %v111 = vstv %s110
    %v112 = vadd.f32 %v109, %v111
    %v113 = vmax.f32 %v112, 0.0
    %s114 = sld [smem:[#allocation9 + $0x1]]
    %v115 = vstv %s114
    %v116 = vmul.f32 %v113, %v115
    %v117 = vadd.f32 %v98, %v116
    %s118 = sld [smem:[#allocation3 + $0x6]]
    %v119 = vstv %s118
    %v120 = vmul.f32 %v72, %v119
    %s121 = sld [smem:[#allocation3 + $0x7]]
    %v122 = vstv %s121
    %v123 = vmul.f32 %v74, %v122
    %v124 = vadd.f32 %v120, %v123
    %s125 = sld [smem:[#allocation3 + $0x8]]
    %v126 = vstv %s125
    %v127 = vmul.f32 %v76, %v126
    %v128 = vadd.f32 %v124, %v127
    %s129 = sld [smem:[#allocation7 + $0x2]]
    %v130 = vstv %s129
    %v131 = vadd.f32 %v128, %v130
    %v132 = vmax.f32 %v131, 0.0
    %s133 = sld [smem:[#allocation9 + $0x2]]
    %v134 = vstv %s133
    %v135 = vmul.f32 %v132, %v134
    %v136 = vadd.f32 %v117, %v135
    %s137 = sld [smem:[#allocation3 + $0x9]]
    %v138 = vstv %s137
    %v139 = vmul.f32 %v72, %v138
    %s140 = sld [smem:[#allocation3 + $0xa]]
    %v141 = vstv %s140
    %v142 = vmul.f32 %v74, %v141
    %v143 = vadd.f32 %v139, %v142
    %s144 = sld [smem:[#allocation3 + $0xb]]
    %v145 = vstv %s144
    %v146 = vmul.f32 %v76, %v145
    %v147 = vadd.f32 %v143, %v146
    %s148 = sld [smem:[#allocation7 + $0x3]]
    %v149 = vstv %s148
    %v150 = vadd.f32 %v147, %v149
    %v151 = vmax.f32 %v150, 0.0
    %s152 = sld [smem:[#allocation9 + $0x3]]
    %v153 = vstv %s152
    %v154 = vmul.f32 %v151, %v153
    %v155 = vadd.f32 %v136, %v154
    %s156 = sld [smem:[#allocation3 + $0xc]]
    %v157 = vstv %s156
    %v158 = vmul.f32 %v72, %v157
    %s159 = sld [smem:[#allocation3 + $0xd]]
    %v160 = vstv %s159
    %v161 = vmul.f32 %v74, %v160
    %v162 = vadd.f32 %v158, %v161
    %s163 = sld [smem:[#allocation3 + $0xe]]
    %v164 = vstv %s163
    %v165 = vmul.f32 %v76, %v164
    %v166 = vadd.f32 %v162, %v165
    %s167 = sld [smem:[#allocation7 + $0x4]]
    %v168 = vstv %s167
    %v169 = vadd.f32 %v166, %v168
    %v170 = vmax.f32 %v169, 0.0
    %s171 = sld [smem:[#allocation9 + $0x4]]
    %v172 = vstv %s171
    %v173 = vmul.f32 %v170, %v172
    %v174 = vadd.f32 %v155, %v173
    %s175 = sld [smem:[#allocation3 + $0xf]]
    %v176 = vstv %s175
    %v177 = vmul.f32 %v72, %v176
    %s178 = sld [smem:[#allocation3 + $0x10]]
    %v179 = vstv %s178
    %v180 = vmul.f32 %v74, %v179
    %v181 = vadd.f32 %v177, %v180
    %s182 = sld [smem:[#allocation3 + $0x11]]
    %v183 = vstv %s182
    %v184 = vmul.f32 %v76, %v183
    %v185 = vadd.f32 %v181, %v184
    %s186 = sld [smem:[#allocation7 + $0x5]]
    %v187 = vstv %s186
    %v188 = vadd.f32 %v185, %v187
    %v189 = vmax.f32 %v188, 0.0
    %s190 = sld [smem:[#allocation9 + $0x5]]
    %v191 = vstv %s190
    %v192 = vmul.f32 %v189, %v191
    %v193 = vadd.f32 %v174, %v192
    %v194 = vsub.f32 0.0, %v193
    %v195 = vmul.f32 %v194, 1.442695
    %v196 = vpow.pop %v195
    %v197 = vadd.f32 %v196, 1.0
    %v198 = vrcp.pop %v197
    %199 = vst [vmem:[#allocation11] sm:$0xff] %v198
    // Predicated region
    $region38: #{tpu_custom_call.1} parent=1 // pred_check
      _
    $region39: #{tpu_custom_call.1} parent=1 // pred_check_branch
      %201 = sbr.rel (0) target = $region41
    $region40: #{tpu_custom_call.1} parent=1 // pred_region
      %s203 = ssub.s32 128, 128
      %204 = vsyncadd [#allocation5], %s203
      %s206 = sshll.u32 [#allocation11], 4
      %s207 = int_to_ptr.vmem [resolvable:$true] %s206
      %209 = dma.vmem_to_hbm [thread:$0]  %s207, 128, %s5, [#allocation5]
    $region41: #{tpu_custom_call.1} parent=1 // pred_fallthru
      _
    // Predicated region
    $region42: #{tpu_custom_call.1} parent=1 // pred_check
      _
    $region43: #{tpu_custom_call.1} parent=1 // pred_check_branch
      %211 = sbr.rel (0) target = $region45
    $region44: #{tpu_custom_call.1} parent=1 // pred_region
      %212 = dma.done [#allocation5], 128
    $region45: #{tpu_custom_call.1} parent=1 // pred_fallthru
      _
    %213 = vsyncpa [#allocation4], 1
    %214 = vsyncpa [#allocation5], 1
    %215 = vsyncpa [#allocation6], 1
    %216 = vsyncpa [#allocation8], 1

</llo_original>
